<compile_context>
chip_gen: v7x
topology: tpu7x:2x2x1
jax: 0.10.0
libtpu: 0.0.40
codegen_flags: <defaults>
</compile_context>

<pallas_src>
import functools

import jax
import jax.numpy as jnp
from jax.experimental import pallas as pl
from jax.experimental.pallas import tpu as pltpu


_LANE = 128
_BUDGET_BYTES = 2 * 1024 * 1024  # per resident buffer; safe on v5e/v6e/v7x defaults


def _sublane_multiple(dtype) -> int:
    """Native sublane packing multiple: 8 (4-byte), 16 (2-byte), 32 (1-byte)."""
    return max(8, 32 // max(1, jnp.dtype(dtype).itemsize))


def _ceil_to(x, m):
    return ((x + m - 1) // m) * m


def _floor_to(x, m):
    return (x // m) * m


def _min_readout_kernel(x_ref, o_ref, *, n_total):
    """Running min over the node axis.

    x_ref: (TB, TN, TD) input tile
    o_ref: (TB, TD) output tile; resident across the node grid axis and used
           directly as the native-dtype running-min accumulator.
    """
    n_idx = pl.program_id(2)
    tn = x_ref.shape[1]

    x = x_ref[...]
    if n_total % tn != 0:
        # Ragged last node chunk: out-of-bounds rows contain garbage.  Replace
        # them with row 0 of this chunk (always in bounds), which is a no-op
        # for the min and avoids a +/-inf identity (unsafe for float8 dtypes).
        node_ids = n_idx * tn + jax.lax.broadcasted_iota(jnp.int32, x.shape, 1)
        x = jnp.where(node_ids < n_total, x, x[:, :1, :])

    chunk_min = jnp.min(x, axis=1)  # (TB, TD), native dtype

    @pl.when(n_idx == 0)
    def _():
        o_ref[...] = chunk_min

    @pl.when(n_idx != 0)
    def _():
        o_ref[...] = jnp.minimum(o_ref[...], chunk_min)


def _pick_tiles(B, N, D, dtype):
    """Choose (TB, TN, TD) under the VMEM budget and the (sublane, 128) rules."""
    sub = _sublane_multiple(dtype)
    itemsize = jnp.dtype(dtype).itemsize
    row_bytes = D * itemsize  # one node-row of one batch row

    # Node chunk: as large as the budget allows assuming a minimal batch block.
    tn_budget = max(sub, _floor_to(_BUDGET_BYTES // max(1, sub * row_bytes), sub))
    TN = N if tn_budget >= N else tn_budget  # full axis (legal) or sublane multiple

    # Batch block: grow in sublane multiples toward the budget (keeps the
    # per-step DMA MB-scale for small-N shapes); bounded by both the input
    # tile and the node-resident output tile.
    tb_cap = min(
        _floor_to(_BUDGET_BYTES // max(1, TN * row_bytes), sub),
        _floor_to(_BUDGET_BYTES // max(1, row_bytes), sub),
    )
    tb_cap = max(sub, tb_cap)
    TB = B if B <= tb_cap else tb_cap  # full dim, or a sublane multiple

    # Split the feature axis only when the batch grid has a single block, so
    # the grid still has parallel extent >= 2 (v7x has 2 TensorCores).
    TD = D
    if pl.cdiv(B, TB) < 2 and D % _LANE == 0 and D >= 2 * _LANE:
        for cand in range(_floor_to(D // 2, _LANE), _LANE - 1, -_LANE):
            if D % cand == 0:
                TD = cand
                break
    return TB, TN, TD


def min_readout(seq: jax.Array, *, tb: int | None = None, tn: int | None = None) -> jax.Array:
    """Pallas equivalent of torch.min(seq, 1).values for seq of shape (B, N, D)."""
    B, N, D = seq.shape
    dtype = seq.dtype
    if B == 0 or D == 0:
        return jnp.zeros((B, D), dtype)
    assert N > 0, "cannot min-reduce over an empty node axis"

    # Lane-density fold: (B, N, D) -> (B, N/k, k*D) with k*D == 128 when D < 128.
    fold_k = 1
    if D < _LANE and _LANE % D == 0 and N % (_LANE // D) == 0:
        fold_k = _LANE // D
    x = seq.reshape(B, N // fold_k, fold_k * D) if fold_k > 1 else seq
    Bf, Nf, Df = x.shape

    auto_tb, auto_tn, TD = _pick_tiles(Bf, Nf, Df, dtype)
    sub = _sublane_multiple(dtype)
    TB = auto_tb if tb is None else tb
    TN = auto_tn if tn is None else tn
    assert TB == Bf or TB % sub == 0, "tb must be a sublane multiple or the full batch"
    assert TN == Nf or TN % sub == 0, "tn must be a sublane multiple or the full node axis"

    grid = (pl.cdiv(Bf, TB), Df // TD, pl.cdiv(Nf, TN))

    itemsize = jnp.dtype(dtype).itemsize
    cost = pl.CostEstimate(
        flops=Bf * Nf * Df,  # one compare/select per element
        transcendentals=0,
        bytes_accessed=(Bf * Nf * Df + Bf * Df) * itemsize,
    )

    out = pl.pallas_call(
        functools.partial(_min_readout_kernel, n_total=Nf),
        out_shape=jax.ShapeDtypeStruct((Bf, Df), dtype),
        grid_spec=pltpu.PrefetchScalarGridSpec(
            num_scalar_prefetch=0,
            grid=grid,
            in_specs=[pl.BlockSpec((TB, TN, TD), lambda b, d, n: (b, n, d))],
            # Output tile stays fixed across the node (reduction) axis and
            # doubles as the native-dtype running-min accumulator.
            out_specs=pl.BlockSpec((TB, TD), lambda b, d, n: (b, d)),
        ),
        compiler_params=pltpu.CompilerParams(
            # batch & feature axes are parallel (megacore on v7x); the node
            # axis is the reduction -> arbitrary, and kept last in the grid.
            dimension_semantics=("parallel", "parallel", "arbitrary"),
        ),
        cost_estimate=cost,
    )(x)

    if fold_k > 1:
        out = jnp.min(out.reshape(B, fold_k, D), axis=1)
    return out


if __name__ == "__main__":
    # Primary check: small shape consistent with the module (B, N, D), f32.
    # D=32 < 128 exercises the lane-density fold path.
    B, N, D = 2, 8, 32
    seq = jax.random.normal(jax.random.PRNGKey(0), (B, N, D), dtype=jnp.float32)
    out = jax.block_until_ready(min_readout(seq))
    ref = jnp.min(seq, axis=1)
    assert out.shape == (B, D)
    assert jnp.array_equal(out, ref), "mismatch vs reference min-reduction (f32, folded D)"

    # bf16 path (sublane multiple 16, native-dtype accumulation).
    B2, N2, D2 = 8, 64, 128
    seq2 = jax.random.normal(jax.random.PRNGKey(1), (B2, N2, D2)).astype(jnp.bfloat16)
    out2 = jax.block_until_ready(min_readout(seq2))
    ref2 = jnp.min(seq2, axis=1)
    assert jnp.array_equal(out2, ref2), "mismatch vs reference min-reduction (bf16)"

    # Ragged batch + ragged node chunks + split feature axis
    # (exercises the cdiv grids, the in-kernel tail masking, and the D split).
    B3, N3, D3 = 20, 20, 256
    seq3 = jax.random.normal(jax.random.PRNGKey(2), (B3, N3, D3), dtype=jnp.float32)
    out3 = jax.block_until_ready(min_readout(seq3, tb=8, tn=8))
    ref3 = jnp.min(seq3, axis=1)
    assert jnp.array_equal(out3, ref3), "mismatch vs reference min-reduction (ragged tiles)"

    print("KERNEL_OK")
</pallas_src>

<mosaic_0001>
module attributes {stable_mosaic.version = 11 : i64} {
  func.func @_min_readout_kernel(%arg0: i32, %arg1: i32, %arg2: i32, %arg3: memref<2x2x128xf32, #tpu.memory_space<vmem>>, %arg4: memref<2x128xf32, #tpu.memory_space<vmem>>) attributes {dimension_semantics = [#tpu.dimension_semantics<parallel>, #tpu.dimension_semantics<parallel>, #tpu.dimension_semantics<arbitrary>], iteration_bounds = array<i64: 1, 1, 1>, scalar_prefetch = 0 : i64, scratch_operands = 0 : i64, tpu.core_type = #tpu.core_type<tc>, window_params = [{transform_indices = @transform_0, window_bounds = array<i64: 2, 2, 128>}, {transform_indices = @transform_1, window_bounds = array<i64: 2, 128>}]} {
    %c0 = arith.constant 0 : index
    %c0_0 = arith.constant 0 : index
    %c0_1 = arith.constant 0 : index
    %0 = vector.load %arg3[%c0, %c0_0, %c0_1] : memref<2x2x128xf32, #tpu.memory_space<vmem>>, vector<2x2x128xf32>
    %cst = arith.constant dense<0x7F800000> : vector<2x128xf32>
    %1 = vector.multi_reduction <minimumf>, %0, %cst [1] : vector<2x2x128xf32> to vector<2x128xf32>
    %c0_i32 = arith.constant 0 : i32
    %2 = arith.cmpi eq, %arg2, %c0_i32 : i32
    %3 = arith.extui %2 : i1 to i32
    %c0_i32_2 = arith.constant 0 : i32
    %4 = arith.cmpi ne, %3, %c0_i32_2 : i32
    scf.if %4 {
      %c0_5 = arith.constant 0 : index
      %c0_6 = arith.constant 0 : index
      %8 = vector.load %arg4[%c0_5, %c0_6] : memref<2x128xf32, #tpu.memory_space<vmem>>, vector<2x128xf32>
      tpu.vector_store %arg4[%c0_5, %c0_6], %1 {strides = array<i32>} : memref<2x128xf32, #tpu.memory_space<vmem>>, vector<2x128xf32>,
    } else {
    }
    %c0_i32_3 = arith.constant 0 : i32
    %5 = arith.cmpi ne, %arg2, %c0_i32_3 : i32
    %6 = arith.extui %5 : i1 to i32
    %c0_i32_4 = arith.constant 0 : i32
    %7 = arith.cmpi ne, %6, %c0_i32_4 : i32
    scf.if %7 {
      %c0_5 = arith.constant 0 : index
      %c0_6 = arith.constant 0 : index
      %8 = vector.load %arg4[%c0_5, %c0_6] : memref<2x128xf32, #tpu.memory_space<vmem>>, vector<2x128xf32>
      %9 = arith.minimumf %8, %1 : vector<2x128xf32>
      %c0_7 = arith.constant 0 : index
      %c0_8 = arith.constant 0 : index
      %10 = vector.load %arg4[%c0_7, %c0_8] : memref<2x128xf32, #tpu.memory_space<vmem>>, vector<2x128xf32>
      tpu.vector_store %arg4[%c0_7, %c0_8], %9 {strides = array<i32>} : memref<2x128xf32, #tpu.memory_space<vmem>>, vector<2x128xf32>,
    } else {
    }
    return
  }
  func.func @transform_0(%arg0: i32, %arg1: i32, %arg2: i32) -> (i32, i32, i32) {
    %c0_i32 = arith.constant 0 : i32
    return %arg0, %arg2, %arg1 : i32, i32, i32
  }
  func.func @transform_1(%arg0: i32, %arg1: i32, %arg2: i32) -> (i32, i32) {
    %c0_i32 = arith.constant 0 : i32
    return %arg0, %arg1 : i32, i32
  }
}

</mosaic_0001>

<llo_original>
// kernel: tpu_custom_call.1
$region0: #{tpu_custom_call.1}
  #allocation0 [shape = 'u32[]', space=smem, size = 0x4, offset = 0x4, fixed_abs, tag = 'smem constant byte address 0x4 - core index']
  #allocation1 [shape = 'u32[144,128]{1,0:T(1,128)}', space=vmem, size = 0x12000, scoped, tag = 'internal scratch']
  %s0 = inlined_call_operand.hbm [shape: f32[2,2,128], index: 0, kind: input, shape index: {}]
  %s1 = inlined_call_operand.hbm [shape: f32[2,128], index: 1, kind: output, shape index: {}]
  %s2 = sld [smem:[#allocation0]]
  $region26: #{tpu_custom_call.1} parent=0
    _
  %s4 = ssub.s32 1, %s2
  %s5 = scalar_select 0, %s4, %s2
  $region1: #{tpu_custom_call.1} parent=0
    #allocation2 [shape = 'u8[2048]{0}', space=vmem, size = 0x800, scoped, tag = 'input window, operand 0, single buffered']
    #allocation3 [shape = 's32[1]{0}', space=sflag, size = 0x4, scoped, tag = 'scoped memory for tpu_custom_call.1']
    #allocation4 [shape = 's32[1]{0}', space=sflag, size = 0x4, scoped, tag = 'scoped memory for tpu_custom_call.1']
    #allocation5 [shape = 'u8[1024]{0}', space=vmem, size = 0x400, scoped, tag = 'output window, operand 0, single buffered']
    %6 = vsyncpa [#allocation3], 0
    %7 = vsyncpa [#allocation4], 0
    // Predicated region
    $region2: #{tpu_custom_call.1} parent=1 // pred_check
      _
    $region3: #{tpu_custom_call.1} parent=1 // pred_check_branch
      %9 = sbr.rel (0) target = $region5
    $region4: #{tpu_custom_call.1} parent=1 // pred_region
      %s11 = ssub.s32 64, 64
      %12 = vsyncadd [#allocation3], %s11
      %s13 = sshll.u32 [#allocation2], 4
      %s14 = int_to_ptr.vmem [resolvable:$true] %s13
      %19 = dma.hbm_to_vmem [thread:$0]  %s0, 64, %s14, [#allocation3], 32, 32, 2
    $region5: #{tpu_custom_call.1} parent=1 // pred_fallthru
      _
    // Predicated region
    $region6: #{tpu_custom_call.1} parent=1 // pred_check
      _
    $region7: #{tpu_custom_call.1} parent=1 // pred_check_branch
      %21 = sbr.rel (0) target = $region9
    $region8: #{tpu_custom_call.1} parent=1 // pred_region
      %22 = dma.done [#allocation3], 64
    $region9: #{tpu_custom_call.1} parent=1 // pred_fallthru
      _
    %v23 = vld [vmem:[#allocation2] sm:$0x3]
    %v24 = vld [vmem:[#allocation2 + $0x2] sm:$0x3]
    %vm25 = vcmask 1041408
    %v26 = vsel %vm25, %v23, inf
    %v27 = vrot.slane %v26, 4
    %v28 = vmin.f32 %v26, %v27
    %v29 = vrot.slane %v28, 2
    %v30 = vmin.f32 %v28, %v29
    %v31 = vrot.slane %v30, 1
    %v32 = vmin.f32 %v30, %v31
    %v33 = vsel %vm25, %v24, inf
    %v34 = vrot.slane %v33, 4
    %v35 = vmin.f32 %v33, %v34
    %v36 = vrot.slane %v35, 2
    %v37 = vmin.f32 %v35, %v36
    %v38 = vrot.slane %v37, 1
    %v39 = vmin.f32 %v37, %v38
    %p40 = scmp.eq.s32.totalorder 0, 0
    // Predicated region
    $region10: #{tpu_custom_call.1} parent=1 // pred_check
      %p41 = pneg %p40
    $region11: #{tpu_custom_call.1} parent=1 // pred_check_branch
      %43 = sbr.rel (%p41) target = $region13
    $region12: #{tpu_custom_call.1} parent=1 // pred_region
      %vm46 = vcmask 1041409
      %v47 = vsel %vm46, %v39, %v32
      %49 = vst [vmem:[#allocation5] sm:$0x3] %v47
    $region13: #{tpu_custom_call.1} parent=1 // pred_fallthru
      _
    %p50 = scmp.ne.s32.totalorder 0, 0
    // Predicated region
    $region14: #{tpu_custom_call.1} parent=1 // pred_check
      %p51 = pneg %p50
    $region15: #{tpu_custom_call.1} parent=1 // pred_check_branch
      %53 = sbr.rel (%p51) target = $region17
    $region16: #{tpu_custom_call.1} parent=1 // pred_region
      %v54 = vld [vmem:[#allocation5] sm:$0x3]
      %vm57 = vcmask 1041409
      %v58 = vsel %vm57, %v39, %v32
      %v60 = vmin.f32 %v54, %v58
      %61 = vst [vmem:[#allocation5] sm:$0x3] %v60
    $region17: #{tpu_custom_call.1} parent=1 // pred_fallthru
      _
    // Predicated region
    $region18: #{tpu_custom_call.1} parent=1 // pred_check
      _
    $region19: #{tpu_custom_call.1} parent=1 // pred_check_branch
      %63 = sbr.rel (0) target = $region21
    $region20: #{tpu_custom_call.1} parent=1 // pred_region
      %s65 = ssub.s32 32, 32
      %66 = vsyncadd [#allocation4], %s65
      %s68 = sshll.u32 [#allocation5], 4
      %s69 = int_to_ptr.vmem [resolvable:$true] %s68
      %71 = dma.vmem_to_hbm [thread:$0]  %s69, 32, %s1, [#allocation4]
    $region21: #{tpu_custom_call.1} parent=1 // pred_fallthru
      _
    // Predicated region
    $region22: #{tpu_custom_call.1} parent=1 // pred_check
      _
    $region23: #{tpu_custom_call.1} parent=1 // pred_check_branch
      %73 = sbr.rel (0) target = $region25
    $region24: #{tpu_custom_call.1} parent=1 // pred_region
      %74 = dma.done [#allocation4], 32
    $region25: #{tpu_custom_call.1} parent=1 // pred_fallthru
      _
    %75 = vsyncpa [#allocation3], 1
    %76 = vsyncpa [#allocation4], 1

</llo_original>
